<compile_context>
chip_gen: v7x
topology: tpu7x:2x2x1
jax: 0.10.0
libtpu: 0.0.40
codegen_flags: <defaults>
</compile_context>

<pallas_src>
import jax
import jax.numpy as jnp
from jax.experimental import pallas as pl
from jax.experimental.pallas import tpu as pltpu

_LANES = 128  # lane width for the small per-row scalar outputs (lane-dense stores)


def _sae_kernel(x_ref, w_enc_ref, b_enc_ref, th_ref, w_dec_ref, b_dec_ref,
                sae_out_ref, acts_ref, l2_ref, l0_ref,
                recon_acc, l0_acc):
    k = pl.program_id(1)            # dict tile index (decoder reduction axis)
    nk = pl.num_programs(1)

    @pl.when(k == 0)
    def _init():
        recon_acc[...] = jnp.zeros_like(recon_acc)
        l0_acc[...] = jnp.zeros_like(l0_acc)

    x_in = x_ref[...]                                    # [tB, A], kept in input dtype
    w_enc = w_enc_ref[...]                               # [A, tD]
    w_dec = w_dec_ref[...]                               # [tD, A]
    b_enc = b_enc_ref[...].astype(jnp.float32)           # [1, tD]
    threshold = th_ref[...].astype(jnp.float32)          # [1, tD] (exp precomputed in wrapper)

    # Encoder slab: x @ W_enc[:, k-tile] + b_enc with f32 accumulation on the MXU.
    pre = jnp.dot(x_in.astype(w_enc.dtype), w_enc,
                  preferred_element_type=jnp.float32) + b_enc

    # Fused ReLU + JumpReLU: exp(log_threshold) > 0, so relu(pre) > th <=> pre > th,
    # and the StepFunction mask (l0) equals this same gate.
    gate = pre > threshold
    acts = jnp.where(gate, pre, 0.0)                     # [tB, tD] f32

    acts_lo = acts.astype(w_dec.dtype)                   # single cast, reused below
    if acts_ref.dtype == w_dec.dtype:
        acts_ref[...] = acts_lo
    else:
        acts_ref[...] = acts.astype(acts_ref.dtype)

    l0_acc[...] += jnp.sum(gate.astype(jnp.float32), axis=-1, keepdims=True)

    # Decoder partial sum, kept resident in VMEM across all dict tiles.
    recon_acc[...] += jnp.dot(acts_lo, w_dec, preferred_element_type=jnp.float32)

    @pl.when(k == nk - 1)
    def _finalize():
        recon = recon_acc[...] + b_dec_ref[...].astype(jnp.float32)
        sae_out_ref[...] = recon.astype(sae_out_ref.dtype)
        diff = recon - x_in.astype(jnp.float32)
        sse_rows = jnp.sum(diff * diff, axis=-1, keepdims=True)     # [tB, 1]
        l2_ref[...] = jnp.broadcast_to(sse_rows, l2_ref.shape)
        l0_ref[...] = jnp.broadcast_to(l0_acc[...], l0_ref.shape)


def _choose_tile(full, target, align):
    """Largest multiple of `align` that divides `full` and is <= target (else full)."""
    if full <= target:
        return full
    t = (min(target, full) // align) * align
    while t >= align:
        if full % t == 0:
            return t
        t -= align
    return full


def _vmem_limit_bytes():
    """VMEM limit: physical capacity minus >=20% headroom for compiler temporaries.
    ~102 MiB on 128 MiB v5e/v6e, ~51 MiB on 64 MiB v7x; 64 MiB fallback if unknown."""
    mib = 1024 * 1024
    try:
        cap = int(pltpu.get_tpu_info().vmem_capacity_bytes)
    except Exception:
        return 64 * mib
    headroom = max(8 * mib, cap // 5)
    return int(cap - headroom)


def _default_tiles(B, A, D, x_bytes, w_bytes, o_bytes, vmem_limit):
    """Pick (tB, tD).  The kernel is HBM-bound on weight streaming (W_enc/W_dec are
    re-read once per batch tile), so tB is made as large as the batch-resident
    slabs allow; tD then fills the remaining VMEM with double-buffered weight tiles."""
    per_tb_resident = A * (x_bytes + o_bytes + 4)        # x + sae_out + f32 recon acc
    tb_target = 1024
    while tb_target > 128 and tb_target * per_tb_resident > (2 * vmem_limit) // 5:
        tb_target //= 2
    b_align = 256 if B % 256 == 0 else (16 if B % 16 == 0 else 8)
    tB = _choose_tile(B, tb_target, b_align)

    resident = tB * per_tb_resident + A * 4              # + b_dec
    budget = max(vmem_limit - resident - (8 << 20), 4 << 20)
    # Per unit of tD: double-buffered W_enc column + W_dec row, double-buffered
    # feature_acts tile, and the b_enc / threshold slivers.
    per_td = 2 * (2 * A * w_bytes + tB * o_bytes + 8)
    d_align = 256 if D % 256 == 0 else 128               # v6e/v7x MXU is 256-wide
    tD = _choose_tile(D, max(budget // per_td, d_align), d_align)
    return tB, tD


def _maybe_buffered(block_shape, index_map, *, buffers=None):
    """BlockSpec with an optional buffer-count override.  Buffered(1) single-buffers
    operands whose block index only changes every nD steps (frees VMEM for tiles)."""
    if buffers is not None:
        try:
            return pl.BlockSpec(block_shape, index_map,
                                pipeline_mode=pl.Buffered(buffers))
        except (AttributeError, TypeError):
            pass
    return pl.BlockSpec(block_shape, index_map)


def jumprelu_sae_forward(x, W_enc, b_enc, log_threshold, W_dec, b_dec,
                         l1_coeff, num_batches_not_active, n_batches_to_dead,
                         *, block_b=None, block_d=None):
    B, A = x.shape
    D = W_enc.shape[1]
    out_dtype = x.dtype

    vmem_limit = _vmem_limit_bytes()
    auto_tB, auto_tD = _default_tiles(
        B, A, D,
        jnp.dtype(x.dtype).itemsize, jnp.dtype(W_enc.dtype).itemsize,
        jnp.dtype(out_dtype).itemsize, vmem_limit)
    tB = block_b if block_b is not None else auto_tB
    tD = block_d if block_d is not None else auto_tD
    assert B % tB == 0 and D % tD == 0, (B, tB, D, tD)
    nB, nD = B // tB, D // tD

    # Precompute the JumpReLU threshold once (no per-grid-step exp in the kernel).
    threshold = jnp.exp(log_threshold.astype(jnp.float32)).reshape(1, D)

    out_shapes = (
        jax.ShapeDtypeStruct((B, A), out_dtype),          # sae_out
        jax.ShapeDtypeStruct((B, D), out_dtype),          # feature_acts
        jax.ShapeDtypeStruct((B, _LANES), jnp.float32),   # per-row sum sq error (lane-bcast)
        jax.ShapeDtypeStruct((B, _LANES), jnp.float32),   # per-row l0 count (lane-bcast)
    )

    sae_out, acts, l2_rows, l0_rows = pl.pallas_call(
        _sae_kernel,
        grid=(nB, nD),
        in_specs=[
            _maybe_buffered((tB, A), lambda i, k: (i, 0), buffers=1),   # x (resident over k)
            pl.BlockSpec((A, tD), lambda i, k: (0, k)),                 # W_enc column tile
            pl.BlockSpec((1, tD), lambda i, k: (0, k)),                 # b_enc tile
            pl.BlockSpec((1, tD), lambda i, k: (0, k)),                 # threshold tile
            pl.BlockSpec((tD, A), lambda i, k: (k, 0)),                 # W_dec row tile
            _maybe_buffered((1, A), lambda i, k: (0, 0), buffers=1),    # b_dec (fully resident)
        ],
        out_specs=[
            _maybe_buffered((tB, A), lambda i, k: (i, 0), buffers=1),   # sae_out
            pl.BlockSpec((tB, tD), lambda i, k: (i, k)),                # feature_acts
            pl.BlockSpec((tB, _LANES), lambda i, k: (i, 0)),            # l2 partials (per-i block)
            pl.BlockSpec((tB, _LANES), lambda i, k: (i, 0)),            # l0 partials (per-i block)
        ],
        out_shape=out_shapes,
        scratch_shapes=[
            pltpu.VMEM((tB, A), jnp.float32),   # reconstruction accumulator
            pltpu.VMEM((tB, 1), jnp.float32),   # per-row l0 accumulator
        ],
        compiler_params=pltpu.CompilerParams(
            dimension_semantics=("parallel", "arbitrary"),
            vmem_limit_bytes=vmem_limit),
    )(x, W_enc, b_enc.reshape(1, D), threshold, W_dec, b_dec.reshape(1, A))

    l2_loss = jnp.sum(l2_rows[:, 0]) / (B * A)     # mean over all elements
    l0 = jnp.sum(l0_rows[:, 0]) / B                # sum over dict, mean over batch
    l0_loss = l1_coeff * l0
    l1_loss = l0_loss
    loss = l2_loss + l1_loss
    num_dead_features = jnp.sum(
        (num_batches_not_active > n_batches_to_dead).astype(jnp.int32))

    return {
        'sae_out': sae_out,
        'feature_acts': acts,
        'num_dead_features': num_dead_features,
        'loss': loss,
        'l1_loss': l1_loss,
        'l2_loss': l2_loss,
        'l0_norm': l0,
        'l1_norm': l0,
    }


def _reference_forward(x, W_enc, b_enc, log_threshold, W_dec, b_dec, l1_coeff):
    pre = jnp.maximum(x @ W_enc + b_enc, 0.0)
    th = jnp.exp(log_threshold)
    acts = pre * (pre > th).astype(jnp.float32)
    recon = acts @ W_dec + b_dec
    l2 = jnp.mean((recon - x) ** 2)
    l0 = jnp.mean(jnp.sum((acts > th).astype(jnp.float32), axis=-1))
    return recon, acts, l2, l0, l2 + l1_coeff * l0


def _check(out, refs, tag):
    ref_recon, ref_acts, ref_l2, ref_l0, ref_loss = refs
    assert jnp.allclose(out['sae_out'], ref_recon, atol=1e-4, rtol=1e-4), tag
    assert jnp.allclose(out['feature_acts'], ref_acts, atol=1e-4, rtol=1e-4), tag
    assert jnp.allclose(out['l2_loss'], ref_l2, atol=1e-4, rtol=1e-4), tag
    assert jnp.allclose(out['l0_norm'], ref_l0, atol=1e-4, rtol=1e-4), tag
    assert jnp.allclose(out['loss'], ref_loss, atol=1e-4, rtol=1e-4), tag
    assert int(out['num_dead_features']) == 0, tag


if __name__ == "__main__":
    # cfg: act_size=128, dict_size=512, batch=16 — small, but exercised both with
    # explicit small tiles (2x4 grid: tests the reduction/accumulator path) and
    # with the auto-derived tiles.
    B, A, D = 16, 128, 512
    l1_coeff = 0.01
    n_batches_to_dead = 5.0

    key = jax.random.PRNGKey(0)
    k_x, k_w = jax.random.split(key)

    x = jax.random.normal(k_x, (B, A), dtype=jnp.float32)

    # Deterministic parameter init mirroring BaseAutoencoder.__init__:
    # kaiming-uniform W_enc, W_dec = row-normalized W_enc.T, zero biases.
    bound = jnp.sqrt(6.0 / A)
    W_enc = jax.random.uniform(k_w, (A, D), minval=-bound, maxval=bound,
                               dtype=jnp.float32)
    W_dec = W_enc.T
    W_dec = W_dec / jnp.linalg.norm(W_dec, axis=-1, keepdims=True)
    b_enc = jnp.zeros((D,), jnp.float32)
    b_dec = jnp.zeros((A,), jnp.float32)
    log_threshold = jnp.zeros((D,), jnp.float32)   # threshold = exp(0) = 1
    num_batches_not_active = jnp.zeros((D,), jnp.float32)

    refs = _reference_forward(x, W_enc, b_enc, log_threshold, W_dec, b_dec, l1_coeff)

    # 1) Explicit small tiles: grid = (2 batch tiles, 4 dict tiles).
    out_tiled = jumprelu_sae_forward(
        x, W_enc, b_enc, log_threshold, W_dec, b_dec,
        l1_coeff, num_batches_not_active, n_batches_to_dead,
        block_b=8, block_d=128)
    jax.block_until_ready(out_tiled)
    _check(out_tiled, refs, "tiled")

    # 2) Auto-derived tiles (VMEM-budgeted defaults).
    out_auto = jumprelu_sae_forward(
        x, W_enc, b_enc, log_threshold, W_dec, b_dec,
        l1_coeff, num_batches_not_active, n_batches_to_dead)
    jax.block_until_ready(out_auto)
    _check(out_auto, refs, "auto")

    print("KERNEL_OK")
</pallas_src>

<mosaic_0001>
module attributes {stable_mosaic.version = 11 : i64} {
  func.func @_sae_kernel(%arg0: i32, %arg1: i32, %arg2: memref<8x128xf32, #tpu.memory_space<vmem>>, %arg3: memref<128x128xf32, #tpu.memory_space<vmem>>, %arg4: memref<1x128xf32, #tpu.memory_space<vmem>>, %arg5: memref<1x128xf32, #tpu.memory_space<vmem>>, %arg6: memref<128x128xf32, #tpu.memory_space<vmem>>, %arg7: memref<1x128xf32, #tpu.memory_space<vmem>>, %arg8: memref<8x128xf32, #tpu.memory_space<vmem>>, %arg9: memref<8x128xf32, #tpu.memory_space<vmem>>, %arg10: memref<8x128xf32, #tpu.memory_space<vmem>>, %arg11: memref<8x128xf32, #tpu.memory_space<vmem>>, %arg12: memref<8x128xf32, #tpu.memory_space<vmem>>, %arg13: memref<8x1xf32, #tpu.memory_space<vmem>>) attributes {dimension_semantics = [#tpu.dimension_semantics<parallel>, #tpu.dimension_semantics<arbitrary>], iteration_bounds = array<i64: 2, 4>, scalar_prefetch = 0 : i64, scratch_operands = 2 : i64, tpu.core_type = #tpu.core_type<tc>, window_params = [{pipeline_mode = #tpu.pipeline_mode<synchronous>, transform_indices = @transform_0, window_bounds = array<i64: 8, 128>}, {transform_indices = @transform_1, window_bounds = array<i64: 128, 128>}, {transform_indices = @transform_2, window_bounds = array<i64: 1, 128>}, {transform_indices = @transform_3, window_bounds = array<i64: 1, 128>}, {transform_indices = @transform_4, window_bounds = array<i64: 128, 128>}, {pipeline_mode = #tpu.pipeline_mode<synchronous>, transform_indices = @transform_5, window_bounds = array<i64: 1, 128>}, {pipeline_mode = #tpu.pipeline_mode<synchronous>, transform_indices = @transform_6, window_bounds = array<i64: 8, 128>}, {transform_indices = @transform_7, window_bounds = array<i64: 8, 128>}, {transform_indices = @transform_8, window_bounds = array<i64: 8, 128>}, {transform_indices = @transform_9, window_bounds = array<i64: 8, 128>}]} {
    %c0_i32 = arith.constant 0 : i32
    %0 = arith.cmpi eq, %arg1, %c0_i32 : i32
    %1 = arith.extui %0 : i1 to i32
    %c0_i32_0 = arith.constant 0 : i32
    %2 = arith.cmpi ne, %1, %c0_i32_0 : i32
    scf.if %2 {
      %cst_24 = arith.constant 0.000000e+00 : f32
      %30 = vector.broadcast %cst_24 : f32 to vector<8x128xf32>
      %c0_25 = arith.constant 0 : index
      %c0_26 = arith.constant 0 : index
      %31 = vector.load %arg12[%c0_25, %c0_26] : memref<8x128xf32, #tpu.memory_space<vmem>>, vector<8x128xf32>
      tpu.vector_store %arg12[%c0_25, %c0_26], %30 {strides = array<i32>} : memref<8x128xf32, #tpu.memory_space<vmem>>, vector<8x128xf32>,
      %cst_27 = arith.constant 0.000000e+00 : f32
      %32 = vector.broadcast %cst_27 : f32 to vector<8x1xf32>
      %c0_28 = arith.constant 0 : index
      %c0_29 = arith.constant 0 : index
      %33 = vector.load %arg13[%c0_28, %c0_29] : memref<8x1xf32, #tpu.memory_space<vmem>>, vector<8x1xf32>
      tpu.vector_store %arg13[%c0_28, %c0_29], %32 {strides = array<i32>} : memref<8x1xf32, #tpu.memory_space<vmem>>, vector<8x1xf32>,
    } else {
    }
    %c0 = arith.constant 0 : index
    %c0_1 = arith.constant 0 : index
    %3 = vector.load %arg2[%c0, %c0_1] : memref<8x128xf32, #tpu.memory_space<vmem>>, vector<8x128xf32>
    %c0_2 = arith.constant 0 : index
    %c0_3 = arith.constant 0 : index
    %4 = vector.load %arg3[%c0_2, %c0_3] : memref<128x128xf32, #tpu.memory_space<vmem>>, vector<128x128xf32>
    %c0_4 = arith.constant 0 : index
    %c0_5 = arith.constant 0 : index
    %5 = vector.load %arg6[%c0_4, %c0_5] : memref<128x128xf32, #tpu.memory_space<vmem>>, vector<128x128xf32>
    %c0_6 = arith.constant 0 : index
    %c0_7 = arith.constant 0 : index
    %6 = vector.load %arg4[%c0_6, %c0_7] : memref<1x128xf32, #tpu.memory_space<vmem>>, vector<1x128xf32>
    %c0_8 = arith.constant 0 : index
    %c0_9 = arith.constant 0 : index
    %7 = vector.load %arg5[%c0_8, %c0_9] : memref<1x128xf32, #tpu.memory_space<vmem>>, vector<1x128xf32>
    %cst = arith.constant dense<0.000000e+00> : vector<8x128xf32>
    %8 = tpu.matmul %3, %4, %cst {dimension_numbers = #tpu.dot_dimension_numbers<[1], [0], [0], [1], [0, 0, 1, 1], [], []>} : vector<8x128xf32>, vector<128x128xf32>, vector<8x128xf32> -> vector<8x128xf32>
    %9 = vector.broadcast %6 : vector<1x128xf32> to vector<8x128xf32>
    %10 = arith.addf %8, %9 : vector<8x128xf32>
    %11 = vector.broadcast %7 : vector<1x128xf32> to vector<8x128xf32>
    %12 = arith.cmpf ogt, %10, %11 : vector<8x128xf32>
    %cst_10 = arith.constant 0.000000e+00 : f32
    %13 = vector.broadcast %cst_10 : f32 to vector<8x128xf32>
    %14 = arith.select %12, %10, %13 : vector<8x128xi1>, vector<8x128xf32>
    %c0_11 = arith.constant 0 : index
    %c0_12 = arith.constant 0 : index
    %15 = vector.load %arg9[%c0_11, %c0_12] : memref<8x128xf32, #tpu.memory_space<vmem>>, vector<8x128xf32>
    tpu.vector_store %arg9[%c0_11, %c0_12], %14 {strides = array<i32>} : memref<8x128xf32, #tpu.memory_space<vmem>>, vector<8x128xf32>,
    %c0_13 = arith.constant 0 : index
    %c0_14 = arith.constant 0 : index
    %16 = vector.load %arg13[%c0_13, %c0_14] : memref<8x1xf32, #tpu.memory_space<vmem>>, vector<8x1xf32>
    %17 = arith.extui %12 : vector<8x128xi1> to vector<8x128xi32>
    %18 = arith.sitofp %17 : vector<8x128xi32> to vector<8x128xf32>
    %cst_15 = arith.constant dense<0.000000e+00> : vector<8xf32>
    %19 = vector.multi_reduction <add>, %18, %cst_15 [1] : vector<8x128xf32> to vector<8xf32>
    %20 = vector.shape_cast %19 : vector<8xf32> to vector<8x1xf32>
    %21 = arith.addf %16, %20 : vector<8x1xf32>
    %c0_16 = arith.constant 0 : index
    %c0_17 = arith.constant 0 : index
    %22 = vector.load %arg13[%c0_16, %c0_17] : memref<8x1xf32, #tpu.memory_space<vmem>>, vector<8x1xf32>
    tpu.vector_store %arg13[%c0_16, %c0_17], %21 {strides = array<i32>} : memref<8x1xf32, #tpu.memory_space<vmem>>, vector<8x1xf32>,
    %c0_18 = arith.constant 0 : index
    %c0_19 = arith.constant 0 : index
    %23 = vector.load %arg12[%c0_18, %c0_19] : memref<8x128xf32, #tpu.memory_space<vmem>>, vector<8x128xf32>
    %cst_20 = arith.constant dense<0.000000e+00> : vector<8x128xf32>
    %24 = tpu.matmul %14, %5, %cst_20 {dimension_numbers = #tpu.dot_dimension_numbers<[1], [0], [0], [1], [0, 0, 1, 1], [], []>} : vector<8x128xf32>, vector<128x128xf32>, vector<8x128xf32> -> vector<8x128xf32>
    %25 = arith.addf %23, %24 : vector<8x128xf32>
    %c0_21 = arith.constant 0 : index
    %c0_22 = arith.constant 0 : index
    %26 = vector.load %arg12[%c0_21, %c0_22] : memref<8x128xf32, #tpu.memory_space<vmem>>, vector<8x128xf32>
    tpu.vector_store %arg12[%c0_21, %c0_22], %25 {strides = array<i32>} : memref<8x128xf32, #tpu.memory_space<vmem>>, vector<8x128xf32>,
    %c3_i32 = arith.constant 3 : i32
    %27 = arith.cmpi eq, %arg1, %c3_i32 : i32
    %28 = arith.extui %27 : i1 to i32
    %c0_i32_23 = arith.constant 0 : i32
    %29 = arith.cmpi ne, %28, %c0_i32_23 : i32
    scf.if %29 {
      %c0_24 = arith.constant 0 : index
      %c0_25 = arith.constant 0 : index
      %30 = vector.load %arg12[%c0_24, %c0_25] : memref<8x128xf32, #tpu.memory_space<vmem>>, vector<8x128xf32>
      %c0_26 = arith.constant 0 : index
      %c0_27 = arith.constant 0 : index
      %31 = vector.load %arg7[%c0_26, %c0_27] : memref<1x128xf32, #tpu.memory_space<vmem>>, vector<1x128xf32>
      %32 = vector.broadcast %31 : vector<1x128xf32> to vector<8x128xf32>
      %33 = arith.addf %30, %32 : vector<8x128xf32>
      %c0_28 = arith.constant 0 : index
      %c0_29 = arith.constant 0 : index
      %34 = vector.load %arg8[%c0_28, %c0_29] : memref<8x128xf32, #tpu.memory_space<vmem>>, vector<8x128xf32>
      tpu.vector_store %arg8[%c0_28, %c0_29], %33 {strides = array<i32>} : memref<8x128xf32, #tpu.memory_space<vmem>>, vector<8x128xf32>,
      %35 = arith.subf %33, %3 : vector<8x128xf32>
      %36 = arith.mulf %35, %35 : vector<8x128xf32>
      %cst_30 = arith.constant dense<0.000000e+00> : vector<8xf32>
      %37 = vector.multi_reduction <add>, %36, %cst_30 [1] : vector<8x128xf32> to vector<8xf32>
      %38 = vector.shape_cast %37 : vector<8xf32> to vector<8x1xf32>
      %39 = vector.shape_cast %38 : vector<8x1xf32> to vector<8x1xf32>
      %40 = vector.broadcast %39 : vector<8x1xf32> to vector<8x128xf32>
      %c0_31 = arith.constant 0 : index
      %c0_32 = arith.constant 0 : index
      %41 = vector.load %arg10[%c0_31, %c0_32] : memref<8x128xf32, #tpu.memory_space<vmem>>, vector<8x128xf32>
      tpu.vector_store %arg10[%c0_31, %c0_32], %40 {strides = array<i32>} : memref<8x128xf32, #tpu.memory_space<vmem>>, vector<8x128xf32>,
      %c0_33 = arith.constant 0 : index
      %c0_34 = arith.constant 0 : index
      %42 = vector.load %arg13[%c0_33, %c0_34] : memref<8x1xf32, #tpu.memory_space<vmem>>, vector<8x1xf32>
      %43 = vector.shape_cast %42 : vector<8x1xf32> to vector<8x1xf32>
      %44 = vector.broadcast %43 : vector<8x1xf32> to vector<8x128xf32>
      %c0_35 = arith.constant 0 : index
      %c0_36 = arith.constant 0 : index
      %45 = vector.load %arg11[%c0_35, %c0_36] : memref<8x128xf32, #tpu.memory_space<vmem>>, vector<8x128xf32>
      tpu.vector_store %arg11[%c0_35, %c0_36], %44 {strides = array<i32>} : memref<8x128xf32, #tpu.memory_space<vmem>>, vector<8x128xf32>,
    } else {
    }
    return
  }
  func.func @transform_0(%arg0: i32, %arg1: i32) -> (i32, i32) {
    %c0_i32 = arith.constant 0 : i32
    %c0_i32_0 = arith.constant 0 : i32
    return %arg0, %c0_i32 : i32, i32
  }
  func.func @transform_1(%arg0: i32, %arg1: i32) -> (i32, i32) {
    %c0_i32 = arith.constant 0 : i32
    %c0_i32_0 = arith.constant 0 : i32
    return %c0_i32, %arg1 : i32, i32
  }
  func.func @transform_2(%arg0: i32, %arg1: i32) -> (i32, i32) {
    %c0_i32 = arith.constant 0 : i32
    %c0_i32_0 = arith.constant 0 : i32
    return %c0_i32, %arg1 : i32, i32
  }
  func.func @transform_3(%arg0: i32, %arg1: i32) -> (i32, i32) {
    %c0_i32 = arith.constant 0 : i32
    %c0_i32_0 = arith.constant 0 : i32
    return %c0_i32, %arg1 : i32, i32
  }
  func.func @transform_4(%arg0: i32, %arg1: i32) -> (i32, i32) {
    %c0_i32 = arith.constant 0 : i32
    %c0_i32_0 = arith.constant 0 : i32
    return %arg1, %c0_i32 : i32, i32
  }
  func.func @transform_5(%arg0: i32, %arg1: i32) -> (i32, i32) {
    %c0_i32 = arith.constant 0 : i32
    %c0_i32_0 = arith.constant 0 : i32
    %c0_i32_1 = arith.constant 0 : i32
    return %c0_i32, %c0_i32_0 : i32, i32
  }
  func.func @transform_6(%arg0: i32, %arg1: i32) -> (i32, i32) {
    %c0_i32 = arith.constant 0 : i32
    %c0_i32_0 = arith.constant 0 : i32
    return %arg0, %c0_i32 : i32, i32
  }
  func.func @transform_7(%arg0: i32, %arg1: i32) -> (i32, i32) {
    %c0_i32 = arith.constant 0 : i32
    return %arg0, %arg1 : i32, i32
  }
  func.func @transform_8(%arg0: i32, %arg1: i32) -> (i32, i32) {
    %c0_i32 = arith.constant 0 : i32
    %c0_i32_0 = arith.constant 0 : i32
    return %arg0, %c0_i32 : i32, i32
  }
  func.func @transform_9(%arg0: i32, %arg1: i32) -> (i32, i32) {
    %c0_i32 = arith.constant 0 : i32
    %c0_i32_0 = arith.constant 0 : i32
    return %arg0, %c0_i32 : i32, i32
  }
}

</mosaic_0001>

<llo_original>
// kernel: tpu_custom_call.1
$region0: #{tpu_custom_call.1}
  #allocation0 [shape = 'u32[]', space=smem, size = 0x4, offset = 0x4, fixed_abs, tag = 'smem constant byte address 0x4 - core index']
  #allocation1 [shape = 'u32[144,128]{1,0:T(1,128)}', space=vmem, size = 0x12000, scoped, tag = 'internal scratch']
  #allocation2 [shape = 'f32[8,128]{1,0:T(8,128)}', space=vmem, size = 0x1000, scoped, tag = 'scratch operand']
  #allocation3 [shape = 'f32[8,1]{1,0:T(8,128)}', space=vmem, size = 0x1000, scoped, tag = 'scratch operand']
  %s0 = inlined_call_operand.hbm [shape: f32[16,128], index: 0, kind: input, shape index: {}]
  %s1 = inlined_call_operand.hbm [shape: f32[128,512], index: 1, kind: input, shape index: {}]
  %s2 = inlined_call_operand.hbm [shape: f32[1,512], index: 2, kind: input, shape index: {}]
  %s3 = inlined_call_operand.hbm [shape: f32[1,512], index: 3, kind: input, shape index: {}]
  %s4 = inlined_call_operand.hbm [shape: f32[512,128], index: 4, kind: input, shape index: {}]
  %s5 = inlined_call_operand.hbm [shape: f32[1,128], index: 5, kind: input, shape index: {}]
  %s6 = inlined_call_operand.hbm [shape: f32[16,128], index: 6, kind: output, shape index: {0}]
  %s7 = inlined_call_operand.hbm [shape: f32[16,512], index: 7, kind: output, shape index: {1}]
  %s8 = inlined_call_operand.hbm [shape: f32[16,128], index: 8, kind: output, shape index: {2}]
  %s9 = inlined_call_operand.hbm [shape: f32[16,128], index: 9, kind: output, shape index: {3}]
  %10 = xla_tuple %s6, %s7, %s8, %s9
  %s11 = sld [smem:[#allocation0]]
  $region113: #{tpu_custom_call.1} parent=0
    _
  %s13 = ssub.s32 1, %s11
  %s14 = scalar_select 0, %s13, %s11
  $region1: #{tpu_custom_call.1} parent=0
    #allocation4 [shape = 'u8[4096]{0}', space=vmem, size = 0x1000, scoped, tag = 'input window, operand 0, single buffered']
    #allocation5 [shape = 's32[2]{0}', space=sflag, size = 0x8, scoped, tag = 'scoped memory for tpu_custom_call.1']
    #allocation6 [shape = 's32[2]{0}', space=sflag, size = 0x8, scoped, tag = 'scoped memory for tpu_custom_call.1']
    #allocation7 [shape = 'u8[131072]{0}', space=vmem, size = 0x20000, scoped, tag = 'input window, operand 1']
    #allocation8 [shape = 's32[2]{0}', space=sflag, size = 0x8, scoped, tag = 'scoped memory for tpu_custom_call.1']
    #allocation9 [shape = 'u8[1024]{0}', space=vmem, size = 0x400, scoped, tag = 'input window, operand 2']
    #allocation10 [shape = 'u8[1024]{0}', space=vmem, size = 0x400, scoped, tag = 'input window, operand 3']
    #allocation11 [shape = 's32[2]{0}', space=sflag, size = 0x8, scoped, tag = 'scoped memory for tpu_custom_call.1']
    #allocation12 [shape = 'u8[131072]{0}', space=vmem, size = 0x20000, scoped, tag = 'input window, operand 4']
    #allocation13 [shape = 'u8[512]{0}', space=vmem, size = 0x400, scoped, tag = 'input window, operand 5, single buffered']
    #allocation14 [shape = 's32[1]{0}', space=sflag, size = 0x4, scoped, tag = 'scoped memory for tpu_custom_call.1']
    #allocation15 [shape = 'u8[4096]{0}', space=vmem, size = 0x1000, scoped, tag = 'output window, operand 0, single buffered']
    #allocation16 [shape = 'u8[8192]{0}', space=vmem, size = 0x2000, scoped, tag = 'output window, operand 1']
    #allocation17 [shape = 's32[2]{0}', space=sflag, size = 0x8, scoped, tag = 'scoped memory for tpu_custom_call.1']
    #allocation18 [shape = 'u8[8192]{0}', space=vmem, size = 0x2000, scoped, tag = 'output window, operand 2']
    #allocation19 [shape = 'u8[8192]{0}', space=vmem, size = 0x2000, scoped, tag = 'output window, operand 3']
    #allocation20 [shape = 's32[2]{0}', space=sflag, size = 0x8, scoped, tag = 'scoped memory for tpu_custom_call.1']
    %15 = vsyncpa [#allocation5], 0
    %16 = vsyncpa [#allocation8], 0
    %s17 = scalar_lea.sflag [#allocation8], 1
    %18 = vsyncpa %s17, 0
    %19 = vsyncpa [#allocation11], 0
    %s20 = scalar_lea.sflag [#allocation11], 1
    %21 = vsyncpa %s20, 0
    %22 = vsyncpa [#allocation14], 0
    %23 = vsyncpa [#allocation6], 0
    %24 = vsyncpa [#allocation17], 0
    %s25 = scalar_lea.sflag [#allocation17], 1
    %26 = vsyncpa %s25, 0
    %27 = vsyncpa [#allocation20], 0
    %s28 = scalar_lea.sflag [#allocation20], 1
    %29 = vsyncpa %s28, 0
    loop: start=0, step=1, limit=10
    $region2: #{tpu_custom_call.1} parent=1 // loop_pre_header
      _
    $region3: #{tpu_custom_call.1} parent=1 // loop_header
      %s31 = sphi 0, %s35
      %p32 = scmp.ge.s32.totalorder %s31, 10
      %s38 = sphi 0, %s50
      %s39 = sphi 0, %s46
      %s40 = sphi 0, %s38
      %s41 = sphi 0, %s39
      %s42 = sphi 0, %s40
      %s43 = sphi 0, %s41
      %s53 = sphi 0, %s55
      %s56 = sphi 0, %s53
      %s57 = sphi 0, %s56
      %s73 = sphi 0, %s57
      %s79 = sphi 0, %s81
      %s82 = sphi 0, %s79
      %s83 = sphi 0, %s82
      %s99 = sphi 0, %s83
      %s105 = sphi 0, %s107
      %s108 = sphi 0, %s105
      %s109 = sphi 0, %s108
      %s125 = sphi 0, %s109
      %s131 = sphi 0, %s133
      %s134 = sphi 0, %s131
      %s135 = sphi 0, %s134
      %s151 = sphi 0, %s135
      %s157 = sphi 0, %s159
      %s160 = sphi 0, %s157
      %s161 = sphi 0, %s160
      %s177 = sphi 0, %s161
      %s181 = sphi 0, %s181
      %s183 = sphi 0, %s181
      %s184 = sphi 0, %s183
      %s198 = sphi 0, %s184
      %s204 = sphi 0, %s206
      %s207 = sphi 0, %s204
      %s208 = sphi 0, %s207
      %s224 = sphi 0, %s208
      %s232 = sphi 0, %s234
      %s235 = sphi 0, %s232
      %s236 = sphi 0, %s235
      %s252 = sphi 0, %s236
      %s258 = sphi 0, %s260
      %s261 = sphi 0, %s258
      %s262 = sphi 0, %s261
      %s278 = sphi 0, %s262
      %s284 = sphi 0, %s286
      %s287 = sphi 0, %s284
      %s288 = sphi 0, %s287
      %s304 = sphi 0, %s288
    $region4: #{tpu_custom_call.1} parent=1 // loop_header_branch
      %34 = sbr.rel (%p32) target = $region8
    $region5: #{tpu_custom_call.1} parent=1 // loop_body
      %s36 = ssub.s32 %s31, 1
      %s37 = ssub.s32 %s31, 2
      %s44 = sadd.s32 1, %s39
      %p45 = scmp.ge.s32.totalorder %s44, 4
      %s46 = scalar_select %p45, 0, %s44
      %s47 = sadd.s32 1, %s38
      %s48 = scalar_select %p45, %s47, %s38
      %p49 = scmp.ge.s32.totalorder %s48, 2
      %s50 = scalar_select %p49, 0, %s48
      %s51 = ssub.s32 %s38, %s50
      %p52 = scmp.eq.s32.totalorder %s51, 0
      %s54 = sadd.s32 %s53, 1
      %s55 = scalar_select %p52, %s53, %s54
      %p58 = pneg %p52
      %p59 = scmp.eq.s32.totalorder %s31, 7
      %p60 = por %p58, %p59
      %p61 = scmp.ne.s32.totalorder %s53, %s56
      %p62 = scmp.eq.s32.totalorder %s31, 0
      %p63 = por %p61, %p62
      %p64 = scmp.ne.s32.totalorder %s53, %s56
      %p65 = scmp.eq.s32.totalorder %s36, 7
      %p66 = por %p64, %p65
      %p67 = scmp.ne.s32.totalorder %s56, %s57
      %p68 = scmp.eq.s32.totalorder %s36, 0
      %p69 = por %p67, %p68
      %p70 = scmp.ne.s32.totalorder %s56, %s57
      %p71 = scmp.eq.s32.totalorder %s37, 7
      %p72 = por %p70, %p71
      %p74 = scmp.ne.s32.totalorder %s57, %s73
      %p75 = scmp.eq.s32.totalorder %s37, 0
      %p76 = por %p74, %p75
      %s77 = ssub.s32 %s39, %s46
      %p78 = scmp.eq.s32.totalorder %s77, 0
      %s80 = sadd.s32 %s79, 1
      %s81 = scalar_select %p78, %s79, %s80
      %p84 = pneg %p78
      %p85 = scmp.eq.s32.totalorder %s31, 7
      %p86 = por %p84, %p85
      %p87 = scmp.ne.s32.totalorder %s79, %s82
      %p88 = scmp.eq.s32.totalorder %s31, 0
      %p89 = por %p87, %p88
      %p90 = scmp.ne.s32.totalorder %s79, %s82
      %p91 = scmp.eq.s32.totalorder %s36, 7
      %p92 = por %p90, %p91
      %p93 = scmp.ne.s32.totalorder %s82, %s83
      %p94 = scmp.eq.s32.totalorder %s36, 0
      %p95 = por %p93, %p94
      %p96 = scmp.ne.s32.totalorder %s82, %s83
      %p97 = scmp.eq.s32.totalorder %s37, 7
      %p98 = por %p96, %p97
      %p100 = scmp.ne.s32.totalorder %s83, %s99
      %p101 = scmp.eq.s32.totalorder %s37, 0
      %p102 = por %p100, %p101
      %s103 = ssub.s32 %s39, %s46
      %p104 = scmp.eq.s32.totalorder %s103, 0
      %s106 = sadd.s32 %s105, 1
      %s107 = scalar_select %p104, %s105, %s106
      %p110 = pneg %p104
      %p111 = scmp.eq.s32.totalorder %s31, 7
      %p112 = por %p110, %p111
      %p113 = scmp.ne.s32.totalorder %s105, %s108
      %p114 = scmp.eq.s32.totalorder %s31, 0
      %p115 = por %p113, %p114
      %p116 = scmp.ne.s32.totalorder %s105, %s108
      %p117 = scmp.eq.s32.totalorder %s36, 7
      %p118 = por %p116, %p117
      %p119 = scmp.ne.s32.totalorder %s108, %s109
      %p120 = scmp.eq.s32.totalorder %s36, 0
      %p121 = por %p119, %p120
      %p122 = scmp.ne.s32.totalorder %s108, %s109
      %p123 = scmp.eq.s32.totalorder %s37, 7
      %p124 = por %p122, %p123
      %p126 = scmp.ne.s32.totalorder %s109, %s125
      %p127 = scmp.eq.s32.totalorder %s37, 0
      %p128 = por %p126, %p127
      %s129 = ssub.s32 %s39, %s46
      %p130 = scmp.eq.s32.totalorder %s129, 0
      %s132 = sadd.s32 %s131, 1
      %s133 = scalar_select %p130, %s131, %s132
      %p136 = pneg %p130
      %p137 = scmp.eq.s32.totalorder %s31, 7
      %p138 = por %p136, %p137
      %p139 = scmp.ne.s32.totalorder %s131, %s134
      %p140 = scmp.eq.s32.totalorder %s31, 0
      %p141 = por %p139, %p140
      %p142 = scmp.ne.s32.totalorder %s131, %s134
      %p143 = scmp.eq.s32.totalorder %s36, 7
      %p144 = por %p142, %p143
      %p145 = scmp.ne.s32.totalorder %s134, %s135
      %p146 = scmp.eq.s32.totalorder %s36, 0
      %p147 = por %p145, %p146
      %p148 = scmp.ne.s32.totalorder %s134, %s135
      %p149 = scmp.eq.s32.totalorder %s37, 7
      %p150 = por %p148, %p149
      %p152 = scmp.ne.s32.totalorder %s135, %s151
      %p153 = scmp.eq.s32.totalorder %s37, 0
      %p154 = por %p152, %p153
      %s155 = ssub.s32 %s39, %s46
      %p156 = scmp.eq.s32.totalorder %s155, 0
      %s158 = sadd.s32 %s157, 1
      %s159 = scalar_select %p156, %s157, %s158
      %p162 = pneg %p156
      %p163 = scmp.eq.s32.totalorder %s31, 7
      %p164 = por %p162, %p163
      %p165 = scmp.ne.s32.totalorder %s157, %s160
      %p166 = scmp.eq.s32.totalorder %s31, 0
      %p167 = por %p165, %p166
      %p168 = scmp.ne.s32.totalorder %s157, %s160
      %p169 = scmp.eq.s32.totalorder %s36, 7
      %p170 = por %p168, %p169
      %p171 = scmp.ne.s32.totalorder %s160, %s161
      %p172 = scmp.eq.s32.totalorder %s36, 0
      %p173 = por %p171, %p172
      %p174 = scmp.ne.s32.totalorder %s160, %s161
      %p175 = scmp.eq.s32.totalorder %s37, 7
      %p176 = por %p174, %p175
      %p178 = scmp.ne.s32.totalorder %s161, %s177
      %p179 = scmp.eq.s32.totalorder %s37, 0
      %p180 = por %p178, %p179
      %s182 = sadd.s32 %s181, 1
      %p185 = scmp.eq.s32.totalorder %s31, 7
      %p186 = scmp.ne.s32.totalorder %s181, %s183
      %p187 = scmp.eq.s32.totalorder %s31, 0
      %p188 = por %p186, %p187
      %p189 = scmp.ne.s32.totalorder %s181, %s183
      %p190 = scmp.eq.s32.totalorder %s36, 7
      %p191 = por %p189, %p190
      %p192 = scmp.ne.s32.totalorder %s183, %s184
      %p193 = scmp.eq.s32.totalorder %s36, 0
      %p194 = por %p192, %p193
      %p195 = scmp.ne.s32.totalorder %s183, %s184
      %p196 = scmp.eq.s32.totalorder %s37, 7
      %p197 = por %p195, %p196
      %p199 = scmp.ne.s32.totalorder %s184, %s198
      %p200 = scmp.eq.s32.totalorder %s37, 0
      %p201 = por %p199, %p200
      %s202 = ssub.s32 %s38, %s50
      %p203 = scmp.eq.s32.totalorder %s202, 0
      %s205 = sadd.s32 %s204, 1
      %s206 = scalar_select %p203, %s204, %s205
      %p209 = pneg %p203
      %p210 = scmp.eq.s32.totalorder %s31, 7
      %p211 = por %p209, %p210
      %p212 = scmp.ne.s32.totalorder %s204, %s207
      %p213 = scmp.eq.s32.totalorder %s31, 0
      %p214 = por %p212, %p213
      %p215 = scmp.ne.s32.totalorder %s204, %s207
      %p216 = scmp.eq.s32.totalorder %s36, 7
      %p217 = por %p215, %p216
      %p218 = scmp.ne.s32.totalorder %s207, %s208
      %p219 = scmp.eq.s32.totalorder %s36, 0
      %p220 = por %p218, %p219
      %p221 = scmp.ne.s32.totalorder %s207, %s208
      %p222 = scmp.eq.s32.totalorder %s37, 7
      %p223 = por %p221, %p222
      %p225 = scmp.ne.s32.totalorder %s208, %s224
      %p226 = scmp.eq.s32.totalorder %s37, 0
      %p227 = por %p225, %p226
      %s228 = ssub.s32 %s38, %s50
      %s229 = ssub.s32 %s39, %s46
      %s230 = sor.u32 %s228, %s229
      %p231 = scmp.eq.s32.totalorder %s230, 0
      %s233 = sadd.s32 %s232, 1
      %s234 = scalar_select %p231, %s232, %s233
      %p237 = pneg %p231
      %p238 = scmp.eq.s32.totalorder %s31, 7
      %p239 = por %p237, %p238
      %p240 = scmp.ne.s32.totalorder %s232, %s235
      %p241 = scmp.eq.s32.totalorder %s31, 0
      %p242 = por %p240, %p241
      %p243 = scmp.ne.s32.totalorder %s232, %s235
      %p244 = scmp.eq.s32.totalorder %s36, 7
      %p245 = por %p243, %p244
      %p246 = scmp.ne.s32.totalorder %s235, %s236
      %p247 = scmp.eq.s32.totalorder %s36, 0
      %p248 = por %p246, %p247
      %p249 = scmp.ne.s32.totalorder %s235, %s236
      %p250 = scmp.eq.s32.totalorder %s37, 7
      %p251 = por %p249, %p250
      %p253 = scmp.ne.s32.totalorder %s236, %s252
      %p254 = scmp.eq.s32.totalorder %s37, 0
      %p255 = por %p253, %p254
      %s256 = ssub.s32 %s38, %s50
      %p257 = scmp.eq.s32.totalorder %s256, 0
      %s259 = sadd.s32 %s258, 1
      %s260 = scalar_select %p257, %s258, %s259
      %p263 = pneg %p257
      %p264 = scmp.eq.s32.totalorder %s31, 7
      %p265 = por %p263, %p264
      %p266 = scmp.ne.s32.totalorder %s258, %s261
      %p267 = scmp.eq.s32.totalorder %s31, 0
      %p268 = por %p266, %p267
      %p269 = scmp.ne.s32.totalorder %s258, %s261
      %p270 = scmp.eq.s32.totalorder %s36, 7
      %p271 = por %p269, %p270
      %p272 = scmp.ne.s32.totalorder %s261, %s262
      %p273 = scmp.eq.s32.totalorder %s36, 0
      %p274 = por %p272, %p273
      %p275 = scmp.ne.s32.totalorder %s261, %s262
      %p276 = scmp.eq.s32.totalorder %s37, 7
      %p277 = por %p275, %p276
      %p279 = scmp.ne.s32.totalorder %s262, %s278
      %p280 = scmp.eq.s32.totalorder %s37, 0
      %p281 = por %p279, %p280
      %s282 = ssub.s32 %s38, %s50
      %p283 = scmp.eq.s32.totalorder %s282, 0
      %s285 = sadd.s32 %s284, 1
      %s286 = scalar_select %p283, %s284, %s285
      %p289 = pneg %p283
      %p290 = scmp.eq.s32.totalorder %s31, 7
      %p291 = por %p289, %p290
      %p292 = scmp.ne.s32.totalorder %s284, %s287
      %p293 = scmp.eq.s32.totalorder %s31, 0
      %p294 = por %p292, %p293
      %p295 = scmp.ne.s32.totalorder %s284, %s287
      %p296 = scmp.eq.s32.totalorder %s36, 7
      %p297 = por %p295, %p296
      %p298 = scmp.ne.s32.totalorder %s287, %s288
      %p299 = scmp.eq.s32.totalorder %s36, 0
      %p300 = por %p298, %p299
      %p301 = scmp.ne.s32.totalorder %s287, %s288
      %p302 = scmp.eq.s32.totalorder %s37, 7
      %p303 = por %p301, %p302
      %p305 = scmp.ne.s32.totalorder %s288, %s304
      %p306 = scmp.eq.s32.totalorder %s37, 0
      %p307 = por %p305, %p306
      %p308 = scmp.le.s32.totalorder 1, %s31
      %p309 = scmp.lt.s32.totalorder %s31, 9
      %p310 = pnand %p308, %p309
      %p311 = pneg %p310
      // Predicated region
      $region9: #{tpu_custom_call.1} parent=5 // pred_check
        _
      $region10: #{tpu_custom_call.1} parent=5 // pred_check_branch
        %313 = sbr.rel (%p310) target = $region12
      $region11: #{tpu_custom_call.1} parent=5 // pred_region
        %s314 = ssub.s32 %s31, 1
        // Predicated region
        $region13: #{tpu_custom_call.1} parent=11 // pred_check
          %p315 = pneg %p69
        $region14: #{tpu_custom_call.1} parent=11 // pred_check_branch
          %317 = sbr.rel (%p315) target = $region16
        $region15: #{tpu_custom_call.1} parent=11 // pred_region
          %s319 = ssub.s32 128, 128
          %320 = vsyncadd [#allocation5], %s319
          %s321 = smul.addr %s40, 128
          %s322 = scalar_lea.hbm %s0, %s321
          %s324 = sshll.u32 [#allocation4], 4
          %s325 = int_to_ptr.vmem [resolvable:$true] %s324
          %327 = dma.hbm_to_vmem [thread:$0]  %s322, 128, %s325, [#allocation5]
        $region16: #{tpu_custom_call.1} parent=11 // pred_fallthru
          _
        // Predicated region
        $region17: #{tpu_custom_call.1} parent=11 // pred_check
          %p328 = pneg %p194
        $region18: #{tpu_custom_call.1} parent=11 // pred_check_branch
          %330 = sbr.rel (%p328) target = $region20
        $region19: #{tpu_custom_call.1} parent=11 // pred_region
          %s332 = ssub.s32 16, 16
          %333 = vsyncadd [#allocation14], %s332
          %s335 = sshll.u32 [#allocation13], 4
          %s336 = int_to_ptr.vmem [resolvable:$true] %s335
          %338 = dma.hbm_to_vmem [thread:$0]  %s5, 16, %s336, [#allocation14]
        $region20: #{tpu_custom_call.1} parent=11 // pred_fallthru
          _
      $region12: #{tpu_custom_call.1} parent=5 // pred_fallthru
        _
      %p339 = scmp.lt.s32.totalorder %s31, 8
      // Predicated region
      $region21: #{tpu_custom_call.1} parent=5 // pred_check
        %p340 = pneg %p339
      $region22: #{tpu_custom_call.1} parent=5 // pred_check_branch
        %342 = sbr.rel (%p340) target = $region24
      $region23: #{tpu_custom_call.1} parent=5 // pred_region
        // Predicated region
        $region25: #{tpu_custom_call.1} parent=23 // pred_check
          %p343 = pneg %p89
        $region26: #{tpu_custom_call.1} parent=23 // pred_check_branch
          %345 = sbr.rel (%p343) target = $region28
        $region27: #{tpu_custom_call.1} parent=23 // pred_region
          %s346 = sand.u32 %s31, 1
          %s347 = scalar_lea.sflag [#allocation8], %s346
          %s348 = sand.u32 %s79, 1
          %s349 = smul.addr %s348, 128
          %s350 = scalar_lea.vmem [#allocation7], %s349
          %s352 = ssub.s32 2048, 2048
          %353 = vsyncadd %s347, %s352
          %s354 = smul.addr %s39, 128
          %s355 = scalar_lea.hbm %s1, %s354
          %s356 = sshll.u32 %s350, 4
          %s357 = int_to_ptr.vmem [resolvable:$true] %s356
          %362 = dma.hbm_to_vmem [thread:$0]  %s355, 2048, %s357, %s347, 512, 128, 8
        $region28: #{tpu_custom_call.1} parent=23 // pred_fallthru
          _
        // Predicated region
        $region29: #{tpu_custom_call.1} parent=23 // pred_check
          %p363 = pneg %p115
        $region30: #{tpu_custom_call.1} parent=23 // pred_check_branch
          %365 = sbr.rel (%p363) target = $region32
        $region31: #{tpu_custom_call.1} parent=23 // pred_region
          %s366 = sand.u32 %s31, 1
          %s367 = scalar_lea.sflag [#allocation8], %s366
          %s368 = sand.u32 %s105, 1
          %s369 = scalar_lea.vmem [#allocation9], %s368
          %s371 = ssub.s32 16, 16
          %372 = vsyncadd %s367, %s371
          %s373 = smul.addr %s39, 16
          %s374 = scalar_lea.hbm %s2, %s373
          %s376 = sshll.u32 %s369, 4
          %s377 = int_to_ptr.vmem [resolvable:$true] %s376
          %379 = dma.hbm_to_vmem [thread:$0]  %s374, 16, %s377, %s367
        $region32: #{tpu_custom_call.1} parent=23 // pred_fallthru
          _
        // Predicated region
        $region33: #{tpu_custom_call.1} parent=23 // pred_check
          %p380 = pneg %p141
        $region34: #{tpu_custom_call.1} parent=23 // pred_check_branch
          %382 = sbr.rel (%p380) target = $region36
        $region35: #{tpu_custom_call.1} parent=23 // pred_region
          %s383 = sand.u32 %s31, 1
          %s384 = scalar_lea.sflag [#allocation11], %s383
          %s385 = sand.u32 %s131, 1
          %s386 = scalar_lea.vmem [#allocation10], %s385
          %s388 = ssub.s32 16, 16
          %389 = vsyncadd %s384, %s388
          %s390 = smul.addr %s39, 16
          %s391 = scalar_lea.hbm %s3, %s390
          %s393 = sshll.u32 %s386, 4
          %s394 = int_to_ptr.vmem [resolvable:$true] %s393
          %396 = dma.hbm_to_vmem [thread:$0]  %s391, 16, %s394, %s384
        $region36: #{tpu_custom_call.1} parent=23 // pred_fallthru
          _
        // Predicated region
        $region37: #{tpu_custom_call.1} parent=23 // pred_check
          %p397 = pneg %p167
        $region38: #{tpu_custom_call.1} parent=23 // pred_check_branch
          %399 = sbr.rel (%p397) target = $region40
        $region39: #{tpu_custom_call.1} parent=23 // pred_region
          %s400 = sand.u32 %s31, 1
          %s401 = scalar_lea.sflag [#allocation11], %s400
          %s402 = sand.u32 %s157, 1
          %s403 = smul.addr %s402, 128
          %s404 = scalar_lea.vmem [#allocation12], %s403
          %s405 = smul.u32 16, %s39
          %s407 = ssub.s32 2048, 2048
          %408 = vsyncadd %s401, %s407
          %s409 = smul.addr %s405, 128
          %s410 = scalar_lea.hbm %s4, %s409
          %s411 = sshll.u32 %s404, 4
          %s412 = int_to_ptr.vmem [resolvable:$true] %s411
          %417 = dma.hbm_to_vmem [thread:$0]  %s410, 2048, %s412, %s401, 128, 128, 8
        $region40: #{tpu_custom_call.1} parent=23 // pred_fallthru
          _
      $region24: #{tpu_custom_call.1} parent=5 // pred_fallthru
        _
      %p418 = scmp.le.s32.totalorder 1, %s31
      %p419 = scmp.lt.s32.totalorder %s31, 9
      %p420 = pnand %p418, %p419
      %p421 = pneg %p420
      // Predicated region
      $region41: #{tpu_custom_call.1} parent=5 // pred_check
        _
      $region42: #{tpu_custom_call.1} parent=5 // pred_check_branch
        %423 = sbr.rel (%p420) target = $region44
      $region43: #{tpu_custom_call.1} parent=5 // pred_region
        %s424 = ssub.s32 %s31, 1
        // Predicated region
        $region45: #{tpu_custom_call.1} parent=43 // pred_check
          %p425 = pneg %p69
        $region46: #{tpu_custom_call.1} parent=43 // pred_check_branch
          %427 = sbr.rel (%p425) target = $region48
        $region47: #{tpu_custom_call.1} parent=43 // pred_region
          %428 = dma.done [#allocation5], 128
        $region48: #{tpu_custom_call.1} parent=43 // pred_fallthru
          _
        %s429 = sand.u32 %s36, 1
        %s430 = scalar_lea.sflag [#allocation8], %s429
        %s431 = sand.u32 %s82, 1
        %s432 = smul.addr %s431, 128
        %s433 = scalar_lea.vmem [#allocation7], %s432
        // Predicated region
        $region49: #{tpu_custom_call.1} parent=43 // pred_check
          %p434 = pneg %p95
        $region50: #{tpu_custom_call.1} parent=43 // pred_check_branch
          %436 = sbr.rel (%p434) target = $region52
        $region51: #{tpu_custom_call.1} parent=43 // pred_region
          %437 = dma.done %s430, 2048
        $region52: #{tpu_custom_call.1} parent=43 // pred_fallthru
          _
        %s438 = sand.u32 %s36, 1
        %s439 = scalar_lea.sflag [#allocation8], %s438
        %s440 = sand.u32 %s108, 1
        %s441 = scalar_lea.vmem [#allocation9], %s440
        // Predicated region
        $region53: #{tpu_custom_call.1} parent=43 // pred_check
          %p442 = pneg %p121
        $region54: #{tpu_custom_call.1} parent=43 // pred_check_branch
          %444 = sbr.rel (%p442) target = $region56
        $region55: #{tpu_custom_call.1} parent=43 // pred_region
          %445 = dma.done %s439, 16
        $region56: #{tpu_custom_call.1} parent=43 // pred_fallthru
          _
        %s446 = sand.u32 %s36, 1
        %s447 = scalar_lea.sflag [#allocation11], %s446
        %s448 = sand.u32 %s134, 1
        %s449 = scalar_lea.vmem [#allocation10], %s448
        // Predicated region
        $region57: #{tpu_custom_call.1} parent=43 // pred_check
          %p450 = pneg %p147
        $region58: #{tpu_custom_call.1} parent=43 // pred_check_branch
          %452 = sbr.rel (%p450) target = $region60
        $region59: #{tpu_custom_call.1} parent=43 // pred_region
          %453 = dma.done %s447, 16
        $region60: #{tpu_custom_call.1} parent=43 // pred_fallthru
          _
        %s454 = sand.u32 %s36, 1
        %s455 = scalar_lea.sflag [#allocation11], %s454
        %s456 = sand.u32 %s160, 1
        %s457 = smul.addr %s456, 128
        %s458 = scalar_lea.vmem [#allocation12], %s457
        // Predicated region
        $region61: #{tpu_custom_call.1} parent=43 // pred_check
          %p459 = pneg %p173
        $region62: #{tpu_custom_call.1} parent=43 // pred_check_branch
          %461 = sbr.rel (%p459) target = $region64
        $region63: #{tpu_custom_call.1} parent=43 // pred_region
          %462 = dma.done %s455, 2048
        $region64: #{tpu_custom_call.1} parent=43 // pred_fallthru
          _
        // Predicated region
        $region65: #{tpu_custom_call.1} parent=43 // pred_check
          %p463 = pneg %p194
        $region66: #{tpu_custom_call.1} parent=43 // pred_check_branch
          %465 = sbr.rel (%p463) target = $region68
        $region67: #{tpu_custom_call.1} parent=43 // pred_region
          %466 = dma.done [#allocation14], 16
        $region68: #{tpu_custom_call.1} parent=43 // pred_fallthru
          _
        %p467 = pneg %p69
        %p468 = pneg %p66
        %s469 = sand.u32 %s36, 1
        %s470 = scalar_lea.sflag [#allocation8], %s469
        %s471 = sand.u32 %s82, 1
        %s472 = smul.addr %s471, 128
        %s473 = scalar_lea.vmem [#allocation7], %s472
        %p474 = pneg %p95
        %p475 = pneg %p92
        %s476 = sand.u32 %s36, 1
        %s477 = scalar_lea.sflag [#allocation8], %s476
        %s478 = sand.u32 %s108, 1
        %s479 = scalar_lea.vmem [#allocation9], %s478
        %p480 = pneg %p121
        %p481 = pneg %p118
        %s482 = sand.u32 %s36, 1
        %s483 = scalar_lea.sflag [#allocation11], %s482
        %s484 = sand.u32 %s134, 1
        %s485 = scalar_lea.vmem [#allocation10], %s484
        %p486 = pneg %p147
        %p487 = pneg %p144
        %s488 = sand.u32 %s36, 1
        %s489 = scalar_lea.sflag [#allocation11], %s488
        %s490 = sand.u32 %s160, 1
        %s491 = smul.addr %s490, 128
        %s492 = scalar_lea.vmem [#allocation12], %s491
        %p493 = pneg %p173
        %p494 = pneg %p170
        %p495 = pneg %p194
        %p496 = pneg %p191
        %p497 = pneg %p220
        %p498 = pneg %p217
        %p499 = pneg %p248
        %p500 = pneg %p245
        %s501 = sand.u32 %s36, 1
        %s502 = scalar_lea.sflag [#allocation17], %s501
        %s503 = sand.u32 %s235, 1
        %s504 = smul.addr %s503, 8
        %s505 = scalar_lea.vmem [#allocation16], %s504
        %p506 = pneg %p274
        %p507 = pneg %p271
        %s508 = sand.u32 %s36, 1
        %s509 = scalar_lea.sflag [#allocation17], %s508
        %s510 = sand.u32 %s261, 1
        %s511 = smul.addr %s510, 8
        %s512 = scalar_lea.vmem [#allocation18], %s511
        %p513 = pneg %p300
        %p514 = pneg %p297
        %s515 = sand.u32 %s287, 1
        %s516 = scalar_lea.sflag [#allocation20], %s515
        %s517 = sand.u32 %s287, 1
        %s518 = smul.addr %s517, 8
        %s519 = scalar_lea.vmem [#allocation19], %s518
        %s520 = smul.u32 16, %s41
        %p521 = scmp.eq.s32.totalorder %s41, 0
        // Predicated region
        $region69: #{tpu_custom_call.1} parent=43 // pred_check
          %p522 = pneg %p521
        $region70: #{tpu_custom_call.1} parent=43 // pred_check_branch
          %524 = sbr.rel (%p522) target = $region72
        $region71: #{tpu_custom_call.1} parent=43 // pred_region
          %525 = vst [vmem:[#allocation2] sm:$0xff] 0.0
          %vm526 = vcmask 7168
          %527 = vst.msk [vmem:[#allocation3] sm:$0xff] %vm526, 0.0
        $region72: #{tpu_custom_call.1} parent=43 // pred_fallthru
          _
        %v528 = vld [vmem:[#allocation4] sm:$0xff]
        %v529 = vld [vmem:[%s433] sm:$0xff]
        %v530 = vld [vmem:[%s433 + $0x8] sm:$0xff]
        %v531 = vld [vmem:[%s433 + $0x10] sm:$0xff]
        %v532 = vld [vmem:[%s433 + $0x18] sm:$0xff]
        %v533 = vld [vmem:[%s433 + $0x20] sm:$0xff]
        %v534 = vld [vmem:[%s433 + $0x28] sm:$0xff]
        %v535 = vld [vmem:[%s433 + $0x30] sm:$0xff]
        %v536 = vld [vmem:[%s433 + $0x38] sm:$0xff]
        %v537 = vld [vmem:[%s433 + $0x40] sm:$0xff]
        %v538 = vld [vmem:[%s433 + $0x48] sm:$0xff]
        %v539 = vld [vmem:[%s433 + $0x50] sm:$0xff]
        %v540 = vld [vmem:[%s433 + $0x58] sm:$0xff]
        %v541 = vld [vmem:[%s433 + $0x60] sm:$0xff]
        %v542 = vld [vmem:[%s433 + $0x68] sm:$0xff]
        %v543 = vld [vmem:[%s433 + $0x70] sm:$0xff]
        %v544 = vld [vmem:[%s433 + $0x78] sm:$0xff]
        %v545 = vld [vmem:[%s458] sm:$0xff]
        %v546 = vld [vmem:[%s458 + $0x8] sm:$0xff]
        %v547 = vld [vmem:[%s458 + $0x10] sm:$0xff]
        %v548 = vld [vmem:[%s458 + $0x18] sm:$0xff]
        %v549 = vld [vmem:[%s458 + $0x20] sm:$0xff]
        %v550 = vld [vmem:[%s458 + $0x28] sm:$0xff]
        %v551 = vld [vmem:[%s458 + $0x30] sm:$0xff]
        %v552 = vld [vmem:[%s458 + $0x38] sm:$0xff]
        %v553 = vld [vmem:[%s458 + $0x40] sm:$0xff]
        %v554 = vld [vmem:[%s458 + $0x48] sm:$0xff]
        %v555 = vld [vmem:[%s458 + $0x50] sm:$0xff]
        %v556 = vld [vmem:[%s458 + $0x58] sm:$0xff]
        %v557 = vld [vmem:[%s458 + $0x60] sm:$0xff]
        %v558 = vld [vmem:[%s458 + $0x68] sm:$0xff]
        %v559 = vld [vmem:[%s458 + $0x70] sm:$0xff]
        %v560 = vld [vmem:[%s458 + $0x78] sm:$0xff]
        %v561 = vld [vmem:[%s441] sm:$0x1]
        %v562 = vld [vmem:[%s449] sm:$0x1]
        %v564 = vlaneseq
        %v565 = vshrl.u32 %v564, 7
        %v566 = vsub.s32 0, %v565
        %v567 = vrot.slane %v561, %v566
        %569 = vmatprep.subr.mxu0 0.0
        %570 = vmatpush1.msra.mxu0 %v529
        %571 = vmatprep.subr.mxu0 0.0
        %572 = vmatpush1.msra.mxu0 %v530
        %573 = vmatprep.subr.mxu0 0.0
        %574 = vmatpush1.msra.mxu0 %v531
        %575 = vmatprep.subr.mxu0 0.0
        %576 = vmatpush1.msra.mxu0 %v532
        %577 = vmatprep.subr.mxu0 0.0
        %578 = vmatpush1.msra.mxu0 %v533
        %579 = vmatprep.subr.mxu0 0.0
        %580 = vmatpush1.msra.mxu0 %v534
        %581 = vmatprep.subr.mxu0 0.0
        %582 = vmatpush1.msra.mxu0 %v535
        %583 = vmatprep.subr.mxu0 0.0
        %584 = vmatpush1.msra.mxu0 %v536
        %585 = vmatprep.subr.mxu0 0.0
        %586 = vmatpush1.msra.mxu0 %v537
        %587 = vmatprep.subr.mxu0 0.0
        %588 = vmatpush1.msra.mxu0 %v538
        %589 = vmatprep.subr.mxu0 0.0
        %590 = vmatpush1.msra.mxu0 %v539
        %591 = vmatprep.subr.mxu0 0.0
        %592 = vmatpush1.msra.mxu0 %v540
        %593 = vmatprep.subr.mxu0 0.0
        %594 = vmatpush1.msra.mxu0 %v541
        %595 = vmatprep.subr.mxu0 0.0
        %596 = vmatpush1.msra.mxu0 %v542
        %597 = vmatprep.subr.mxu0 0.0
        %598 = vmatpush1.msra.mxu0 %v543
        %599 = vmatprep.subr.mxu0 0.0
        %600 = vmatpush1.msra.mxu0 %v544
        %601 = vmatprep.subr.mxu0 0.0
        %602 = vmatpush1.msra.mxu0 0.0
        %603 = vmatprep.subr.mxu0 0.0
        %604 = vmatpush1.msra.mxu0 0.0
        %605 = vmatprep.subr.mxu0 0.0
        %606 = vmatpush1.msra.mxu0 0.0
        %607 = vmatprep.subr.mxu0 0.0
        %608 = vmatpush1.msra.mxu0 0.0
        %609 = vmatprep.subr.mxu0 0.0
        %610 = vmatpush1.msra.mxu0 0.0
        %611 = vmatprep.subr.mxu0 0.0
        %612 = vmatpush1.msra.mxu0 0.0
        %613 = vmatprep.subr.mxu0 0.0
        %614 = vmatpush1.msra.mxu0 0.0
        %615 = vmatprep.subr.mxu0 0.0
        %616 = vmatpush1.msra.mxu0 0.0
        %617 = vmatprep.subr.mxu0 0.0
        %618 = vmatpush1.msra.mxu0 0.0
        %619 = vmatprep.subr.mxu0 0.0
        %620 = vmatpush1.msra.mxu0 0.0
        %621 = vmatprep.subr.mxu0 0.0
        %622 = vmatpush1.msra.mxu0 0.0
        %623 = vmatprep.subr.mxu0 0.0
        %624 = vmatpush1.msra.mxu0 0.0
        %625 = vmatprep.subr.mxu0 0.0
        %626 = vmatpush1.msra.mxu0 0.0
        %627 = vmatprep.subr.mxu0 0.0
        %628 = vmatpush1.msra.mxu0 0.0
        %629 = vmatprep.subr.mxu0 0.0
        %630 = vmatpush1.msra.mxu0 0.0
        %631 = vmatprep.subr.mxu0 0.0
        %632 = vmatpush1.msra.mxu0 0.0
        %633 = vmatprep.mubr.f32.mxu0 0.0
        %634 = vmatmul.mubr.f32.gmra.mrb[0].mxu0 %v528
        %v635 = vpop.f32.mrb[0].mxu0
        %v636 = vadd.f32 %v567, %v635
        %v637 = vpop.f32.mrb[0].mxu0
        %638 = vdwg.mxu0
        %v640 = vlaneseq
        %v641 = vshrl.u32 %v640, 7
        %v642 = vsub.s32 0, %v641
        %v643 = vrot.slane %v562, %v642
        %vm645 = vcmp.gt.f32.partialorder %v636, %v643
        %v646 = vsel %vm645, %v636, 0.0
        %647 = vst [vmem:[%s505] sm:$0xff] %v646
        %v648 = vld [vmem:[#allocation3] sm:$0xff]
        %v649 = vsel %vm645, 1, 0
        %v650 = vcvt.s32.f32 %v649
        %651 = vadd.xlane.f32.xlu0 %v650
        %v652 = vpop.xlane.xlu0 %651
        %v653 = vadd.f32 %v648, %v652
        %vm654 = vcmask 7168
        %655 = vst.msk [vmem:[#allocation3] sm:$0xff] %vm654, %v653
        %v656 = vld [vmem:[#allocation2] sm:$0xff]
        %657 = vmatprep.subr.mxu0 0.0
        %658 = vmatpush1.msra.mxu0 %v545
        %659 = vmatprep.subr.mxu0 0.0
        %660 = vmatpush1.msra.mxu0 %v546
        %661 = vmatprep.subr.mxu0 0.0
        %662 = vmatpush1.msra.mxu0 %v547
        %663 = vmatprep.subr.mxu0 0.0
        %664 = vmatpush1.msra.mxu0 %v548
        %665 = vmatprep.subr.mxu0 0.0
        %666 = vmatpush1.msra.mxu0 %v549
        %667 = vmatprep.subr.mxu0 0.0
        %668 = vmatpush1.msra.mxu0 %v550
        %669 = vmatprep.subr.mxu0 0.0
        %670 = vmatpush1.msra.mxu0 %v551
        %671 = vmatprep.subr.mxu0 0.0
        %672 = vmatpush1.msra.mxu0 %v552
        %673 = vmatprep.subr.mxu0 0.0
        %674 = vmatpush1.msra.mxu0 %v553
        %675 = vmatprep.subr.mxu0 0.0
        %676 = vmatpush1.msra.mxu0 %v554
        %677 = vmatprep.subr.mxu0 0.0
        %678 = vmatpush1.msra.mxu0 %v555
        %679 = vmatprep.subr.mxu0 0.0
        %680 = vmatpush1.msra.mxu0 %v556
        %681 = vmatprep.subr.mxu0 0.0
        %682 = vmatpush1.msra.mxu0 %v557
        %683 = vmatprep.subr.mxu0 0.0
        %684 = vmatpush1.msra.mxu0 %v558
        %685 = vmatprep.subr.mxu0 0.0
        %686 = vmatpush1.msra.mxu0 %v559
        %687 = vmatprep.subr.mxu0 0.0
        %688 = vmatpush1.msra.mxu0 %v560
        %689 = vmatprep.subr.mxu0 0.0
        %690 = vmatpush1.msra.mxu0 0.0
        %691 = vmatprep.subr.mxu0 0.0
        %692 = vmatpush1.msra.mxu0 0.0
        %693 = vmatprep.subr.mxu0 0.0
        %694 = vmatpush1.msra.mxu0 0.0
        %695 = vmatprep.subr.mxu0 0.0
        %696 = vmatpush1.msra.mxu0 0.0
        %697 = vmatprep.subr.mxu0 0.0
        %698 = vmatpush1.msra.mxu0 0.0
        %699 = vmatprep.subr.mxu0 0.0
        %700 = vmatpush1.msra.mxu0 0.0
        %701 = vmatprep.subr.mxu0 0.0
        %702 = vmatpush1.msra.mxu0 0.0
        %703 = vmatprep.subr.mxu0 0.0
        %704 = vmatpush1.msra.mxu0 0.0
        %705 = vmatprep.subr.mxu0 0.0
        %706 = vmatpush1.msra.mxu0 0.0
        %707 = vmatprep.subr.mxu0 0.0
        %708 = vmatpush1.msra.mxu0 0.0
        %709 = vmatprep.subr.mxu0 0.0
        %710 = vmatpush1.msra.mxu0 0.0
        %711 = vmatprep.subr.mxu0 0.0
        %712 = vmatpush1.msra.mxu0 0.0
        %713 = vmatprep.subr.mxu0 0.0
        %714 = vmatpush1.msra.mxu0 0.0
        %715 = vmatprep.subr.mxu0 0.0
        %716 = vmatpush1.msra.mxu0 0.0
        %717 = vmatprep.subr.mxu0 0.0
        %718 = vmatpush1.msra.mxu0 0.0
        %719 = vmatprep.subr.mxu0 0.0
        %720 = vmatpush1.msra.mxu0 0.0
        %721 = vmatprep.mubr.f32.mxu0 0.0
        %722 = vmatmul.mubr.f32.gmra.mrb[0].mxu0 %v646
        %v723 = vpop.f32.mrb[0].mxu0
        %v724 = vadd.f32 0.0, %v723
        %v725 = vpop.f32.mrb[0].mxu0
        %726 = vdwg.mxu0
        %v727 = vadd.f32 %v656, %v724
        %728 = vst [vmem:[#allocation2] sm:$0xff] %v727
        %p729 = scmp.eq.s32.totalorder %s41, 3
        // Predicated region
        $region73: #{tpu_custom_call.1} parent=43 // pred_check
          %p730 = pneg %p729
        $region74: #{tpu_custom_call.1} parent=43 // pred_check_branch
          %732 = sbr.rel (%p730) target = $region76
        $region75: #{tpu_custom_call.1} parent=43 // pred_region
          %v733 = vld [vmem:[#allocation2] sm:$0xff]
          %v734 = vld [vmem:[#allocation13] sm:$0x1]
          %v736 = vlaneseq
          %v737 = vshrl.u32 %v736, 7
          %v738 = vsub.s32 0, %v737
          %v739 = vrot.slane %v734, %v738
          %v741 = vadd.f32 %v733, %v739
          %742 = vst [vmem:[#allocation15] sm:$0xff] %v741
          %v743 = vsub.f32 %v741, %v528
          %v744 = vmul.f32 %v743, %v743
          %745 = vadd.xlane.f32.xlu0 %v744
          %v746 = vpop.xlane.xlu0 %745
          %747 = vst [vmem:[%s512] sm:$0xff] %v746
          %v748 = vld [vmem:[#allocation3] sm:$0xff]
          %750 = vset.pattern.permute.xlu0 0
          %751 = vperm.xlu0 %750, %v748
          %v752 = vpop.permute.xlu0 %751
          %754 = vst [vmem:[%s519] sm:$0xff] %v752
        $region76: #{tpu_custom_call.1} parent=43 // pred_fallthru
          _
        %s755 = sand.u32 %s36, 1
        %s756 = scalar_lea.sflag [#allocation17], %s755
        %s757 = sand.u32 %s235, 1
        %s758 = smul.addr %s757, 8
        %s759 = scalar_lea.vmem [#allocation16], %s758
        %s760 = sand.u32 %s36, 1
        %s761 = scalar_lea.sflag [#allocation17], %s760
        %s762 = sand.u32 %s261, 1
        %s763 = smul.addr %s762, 8
        %s764 = scalar_lea.vmem [#allocation18], %s763
        %s765 = sand.u32 %s287, 1
        %s766 = scalar_lea.sflag [#allocation20], %s765
        %s767 = sand.u32 %s287, 1
        %s768 = smul.addr %s767, 8
        %s769 = scalar_lea.vmem [#allocation19], %s768
        // Predicated region
        $region77: #{tpu_custom_call.1} parent=43 // pred_check
          %p770 = pneg %p217
        $region78: #{tpu_custom_call.1} parent=43 // pred_check_branch
          %772 = sbr.rel (%p770) target = $region80
        $region79: #{tpu_custom_call.1} parent=43 // pred_region
          %s774 = ssub.s32 128, 128
          %775 = vsyncadd [#allocation6], %s774
          %s776 = smul.addr %s40, 128
          %s777 = scalar_lea.hbm %s6, %s776
          %s779 = sshll.u32 [#allocation15], 4
          %s780 = int_to_ptr.vmem [resolvable:$true] %s779
          %782 = dma.vmem_to_hbm [thread:$0]  %s780, 128, %s777, [#allocation6]
        $region80: #{tpu_custom_call.1} parent=43 // pred_fallthru
          _
        // Predicated region
        $region81: #{tpu_custom_call.1} parent=43 // pred_check
          %p783 = pneg %p245
        $region82: #{tpu_custom_call.1} parent=43 // pred_check_branch
          %785 = sbr.rel (%p783) target = $region84
        $region83: #{tpu_custom_call.1} parent=43 // pred_region
          %s787 = ssub.s32 128, 128
          %788 = vsyncadd %s756, %s787
          %s789 = smul.addr %s40, 4
          %s790 = sadd.s32 %s41, %s789
          %s791 = smul.addr %s790, 128
          %s792 = scalar_lea.hbm %s7, %s791
          %s794 = sshll.u32 %s759, 4
          %s795 = int_to_ptr.vmem [resolvable:$true] %s794
          %797 = dma.vmem_to_hbm [thread:$0]  %s795, 128, %s792, %s756
        $region84: #{tpu_custom_call.1} parent=43 // pred_fallthru
          _
        // Predicated region
        $region85: #{tpu_custom_call.1} parent=43 // pred_check
          %p798 = pneg %p271
        $region86: #{tpu_custom_call.1} parent=43 // pred_check_branch
          %800 = sbr.rel (%p798) target = $region88
        $region87: #{tpu_custom_call.1} parent=43 // pred_region
          %s802 = ssub.s32 128, 128
          %803 = vsyncadd %s761, %s802
          %s804 = smul.addr %s40, 128
          %s805 = scalar_lea.hbm %s8, %s804
          %s807 = sshll.u32 %s764, 4
          %s808 = int_to_ptr.vmem [resolvable:$true] %s807
          %810 = dma.vmem_to_hbm [thread:$0]  %s808, 128, %s805, %s761
        $region88: #{tpu_custom_call.1} parent=43 // pred_fallthru
          _
        // Predicated region
        $region89: #{tpu_custom_call.1} parent=43 // pred_check
          %p811 = pneg %p297
        $region90: #{tpu_custom_call.1} parent=43 // pred_check_branch
          %813 = sbr.rel (%p811) target = $region92
        $region91: #{tpu_custom_call.1} parent=43 // pred_region
          %s815 = ssub.s32 128, 128
          %816 = vsyncadd %s766, %s815
          %s817 = smul.addr %s40, 128
          %s818 = scalar_lea.hbm %s9, %s817
          %s820 = sshll.u32 %s769, 4
          %s821 = int_to_ptr.vmem [resolvable:$true] %s820
          %823 = dma.vmem_to_hbm [thread:$0]  %s821, 128, %s818, %s766
        $region92: #{tpu_custom_call.1} parent=43 // pred_fallthru
          _
        // Predicated region
        $region93: #{tpu_custom_call.1} parent=43 // pred_check
          %p824 = pneg %p217
        $region94: #{tpu_custom_call.1} parent=43 // pred_check_branch
          %826 = sbr.rel (%p824) target = $region96
        $region95: #{tpu_custom_call.1} parent=43 // pred_region
          %827 = dma.done [#allocation6], 128
        $region96: #{tpu_custom_call.1} parent=43 // pred_fallthru
          _
      $region44: #{tpu_custom_call.1} parent=5 // pred_fallthru
        _
      %p828 = scmp.le.s32.totalorder 2, %s31
      // Predicated region
      $region97: #{tpu_custom_call.1} parent=5 // pred_check
        %p829 = pneg %p828
      $region98: #{tpu_custom_call.1} parent=5 // pred_check_branch
        %831 = sbr.rel (%p829) target = $region100
      $region99: #{tpu_custom_call.1} parent=5 // pred_region
        %s832 = ssub.s32 %s31, 2
        // Predicated region
        $region101: #{tpu_custom_call.1} parent=99 // pred_check
          %p833 = pneg %p251
        $region102: #{tpu_custom_call.1} parent=99 // pred_check_branch
          %835 = sbr.rel (%p833) target = $region104
        $region103: #{tpu_custom_call.1} parent=99 // pred_region
          %s836 = sand.u32 %s37, 1
          %s837 = scalar_lea.sflag [#allocation17], %s836
          %s838 = sand.u32 %s236, 1
          %s839 = smul.addr %s838, 8
          %s840 = scalar_lea.vmem [#allocation16], %s839
          %841 = dma.done %s837, 128
        $region104: #{tpu_custom_call.1} parent=99 // pred_fallthru
          _
        // Predicated region
        $region105: #{tpu_custom_call.1} parent=99 // pred_check
          %p842 = pneg %p277
        $region106: #{tpu_custom_call.1} parent=99 // pred_check_branch
          %844 = sbr.rel (%p842) target = $region108
        $region107: #{tpu_custom_call.1} parent=99 // pred_region
          %s845 = sand.u32 %s37, 1
          %s846 = scalar_lea.sflag [#allocation17], %s845
          %s847 = sand.u32 %s262, 1
          %s848 = smul.addr %s847, 8
          %s849 = scalar_lea.vmem [#allocation18], %s848
          %850 = dma.done %s846, 128
        $region108: #{tpu_custom_call.1} parent=99 // pred_fallthru
          _
        // Predicated region
        $region109: #{tpu_custom_call.1} parent=99 // pred_check
          %p851 = pneg %p303
        $region110: #{tpu_custom_call.1} parent=99 // pred_check_branch
          %853 = sbr.rel (%p851) target = $region112
        $region111: #{tpu_custom_call.1} parent=99 // pred_region
          %s854 = sand.u32 %s288, 1
          %s855 = scalar_lea.sflag [#allocation20], %s854
          %s856 = sand.u32 %s288, 1
          %s857 = smul.addr %s856, 8
          %s858 = scalar_lea.vmem [#allocation19], %s857
          %859 = dma.done %s855, 128
        $region112: #{tpu_custom_call.1} parent=99 // pred_fallthru
          _
      $region100: #{tpu_custom_call.1} parent=5 // pred_fallthru
        _
    $region6: #{tpu_custom_call.1} parent=1 // loop_footer
      %s35 = sadd.s32 1, %s31
    $region7: #{tpu_custom_call.1} parent=1 // loop_footer_branch
      %30 = sbr.rel target = $region3
    $region8: #{tpu_custom_call.1} parent=1 // loop_exit
      _
    %860 = vsyncpa [#allocation5], 1
    %s861 = scalar_lea.sflag [#allocation5], 1
    %862 = vsyncpa %s861, 1
    %863 = vsyncpa [#allocation8], 1
    %s864 = scalar_lea.sflag [#allocation8], 1
    %865 = vsyncpa %s864, 1
    %866 = vsyncpa [#allocation11], 1
    %s867 = scalar_lea.sflag [#allocation11], 1
    %868 = vsyncpa %s867, 1
    %869 = vsyncpa [#allocation14], 1
    %870 = vsyncpa [#allocation6], 1
    %s871 = scalar_lea.sflag [#allocation6], 1
    %872 = vsyncpa %s871, 1
    %873 = vsyncpa [#allocation17], 1
    %s874 = scalar_lea.sflag [#allocation17], 1
    %875 = vsyncpa %s874, 1
    %876 = vsyncpa [#allocation20], 1
    %s877 = scalar_lea.sflag [#allocation20], 1
    %878 = vsyncpa %s877, 1

</llo_original>
